<compile_context>
chip_gen: v7x
topology: tpu7x:2x2x1
jax: 0.10.0
libtpu: 0.0.40
codegen_flags: <defaults>
</compile_context>

<pallas_src>
import functools

import jax
import jax.numpy as jnp
from jax import lax
from jax.experimental import pallas as pl
from jax.experimental.pallas import tpu as pltpu


def _disc_kernel(img_ref, lab_ref, w1_ref, b1_ref, w2_ref, b2_ref, w3i_ref,
                 out_ref):
    x = img_ref[...]                                             # (TB, Kp)

    # fc_image layer 1: Linear(784 -> 256) + LeakyReLU(0.2)      (MXU, f32 acc)
    h1 = jnp.dot(x, w1_ref[...], preferred_element_type=jnp.float32)
    h1 = h1 + b1_ref[...]
    h1 = jnp.where(h1 > 0, h1, 0.2 * h1)

    # fc_image layer 2: Linear(256 -> 128) + LeakyReLU(0.2)      (MXU, f32 acc)
    h1 = h1.astype(w2_ref.dtype)
    h2 = jnp.dot(h1, w2_ref[...], preferred_element_type=jnp.float32)
    h2 = h2 + b2_ref[...]
    h2 = jnp.where(h2 > 0, h2, 0.2 * h2)                         # (TB, 128) f32

    # fc_combined (image half): 128 -> 1 projection computed lane-dense as a
    # (1, TB) row: W3_img_row (1,128) contracted with h2 (TB,128) over 128.
    logit = lax.dot_general(w3i_ref[...], h2, (((1,), (1,)), ((), ())),
                            preferred_element_type=jnp.float32)  # (1, TB)

    # + precomputed per-label (Emb @ W3_lab + b3) term, then sigmoid (EUP).
    out_ref[0] = jax.nn.sigmoid(logit + lab_ref[0])


def _round_up(x, m):
    return (x + m - 1) // m * m


def _choose_tile(batch, block_b):
    b8 = _round_up(batch, 8)
    tb = min(_round_up(int(block_b), 8), b8)
    # v7x has 2 TensorCores; the "parallel" grid axis only uses both when the
    # grid has >= 2 steps.  Halve the tile for single-step grids (v5e/v6e: noop).
    if -(-b8 // tb) < 2 and b8 >= 16:
        tb = _round_up(-(-b8 // 2), 8)
    bp = _round_up(b8, tb)
    return tb, bp


@functools.partial(jax.jit, static_argnames=("block_b", "compute_dtype"))
def conditional_discriminator(image, label, params, *, block_b=1024,
                              compute_dtype=jnp.bfloat16):
    """image: (B, image_dim) float; label: (B,) int32 -> (B, 1) float32.

    `compute_dtype` only affects the two big matmul operands (accumulation is
    always f32).  bf16 (default) is the fast path on every TPU generation;
    pass jnp.float32 for bit-accurate f32 matmuls.
    """
    B, image_dim = image.shape
    TB, Bp = _choose_tile(B, block_b)
    G = Bp // TB
    Kp = _round_up(image_dim, 128)          # 784 -> 896: no ragged K tail tile

    # ---- wrapper-side exact precomputations --------------------------------
    # Per-label logit + bias:  e @ W3_lab + b3 == (Emb @ W3_lab)[label] + b3
    lab = (params["emb"] @ params["w3_lab"])[label][:, 0]
    lab = lab + params["b3"].reshape(())
    lab = jnp.pad(lab.astype(jnp.float32), (0, Bp - B)).reshape(G, 1, TB)

    # Image: cast + K-pad + row-pad in one fused pass over the array.
    img = jnp.pad(image.astype(compute_dtype),
                  ((0, Bp - B), (0, Kp - image_dim)))
    w1 = jnp.pad(params["w1"],
                 ((0, Kp - image_dim), (0, 0))).astype(compute_dtype)
    w2 = params["w2"].astype(compute_dtype)
    b1 = params["b1"].astype(jnp.float32)
    b2 = params["b2"].astype(jnp.float32)
    w3i = params["w3_img"].T.astype(jnp.float32)                 # (1, 128)

    def resident(shape):
        # Constant block index -> stays resident in VMEM across grid steps.
        return pl.BlockSpec(shape, lambda i: (0,) * len(shape))

    out = pl.pallas_call(
        _disc_kernel,
        out_shape=jax.ShapeDtypeStruct((G, 1, TB), jnp.float32),
        grid=(G,),
        in_specs=[
            pl.BlockSpec((TB, Kp), lambda i: (i, 0)),        # image tile
            pl.BlockSpec((1, 1, TB), lambda i: (i, 0, 0)),   # per-label term
            resident(w1.shape),                              # (Kp, 256)
            resident(b1.shape),                              # (1, 256)
            resident(w2.shape),                              # (256, 128)
            resident(b2.shape),                              # (1, 128)
            resident(w3i.shape),                             # (1, 128)
        ],
        out_specs=pl.BlockSpec((1, 1, TB), lambda i: (i, 0, 0)),
        compiler_params=pltpu.CompilerParams(
            dimension_semantics=("parallel",)),              # megacore sharding
    )(img, lab, w1, b1, w2, b2, w3i)

    return out.reshape(Bp)[:B, None]


def init_params(key, image_dim=784, num_classes=10):
    ks = jax.random.split(key, 8)

    def u(k, shape, fan_in):
        bound = 1.0 / jnp.sqrt(fan_in)
        return jax.random.uniform(k, shape, jnp.float32, -bound, bound)

    return {
        "w1": u(ks[0], (image_dim, 256), image_dim),
        "b1": u(ks[1], (1, 256), image_dim),
        "w2": u(ks[2], (256, 128), 256),
        "b2": u(ks[3], (1, 128), 256),
        "emb": jax.random.normal(ks[4], (num_classes, 128), jnp.float32),
        "w3_img": u(ks[5], (128, 1), 256),   # first 128 rows of fc_combined W
        "w3_lab": u(ks[6], (128, 1), 256),   # last 128 rows of fc_combined W
        "b3": u(ks[7], (1, 1), 256),
    }


def reference_forward(image, label, p):
    """Pure-JAX reference mirroring the PyTorch module (with concat)."""
    h1 = image @ p["w1"] + p["b1"]
    h1 = jnp.where(h1 > 0, h1, 0.2 * h1)
    h2 = h1 @ p["w2"] + p["b2"]
    h2 = jnp.where(h2 > 0, h2, 0.2 * h2)
    e = p["emb"][label]
    combined = jnp.concatenate([h2, e], axis=1)
    w3 = jnp.concatenate([p["w3_img"], p["w3_lab"]], axis=0)
    logit = combined @ w3 + p["b3"]
    return jax.nn.sigmoid(logit)


if __name__ == "__main__":
    key = jax.random.PRNGKey(0)
    k_img, k_lab, k_par = jax.random.split(key, 3)

    B, IMAGE_DIM, NUM_CLASSES = 8, 784, 10
    image = jax.random.normal(k_img, (B, IMAGE_DIM), jnp.float32)
    label = jax.random.randint(k_lab, (B,), 0, NUM_CLASSES, jnp.int32)
    params = init_params(k_par, IMAGE_DIM, NUM_CLASSES)

    ref = reference_forward(image, label, params)

    # Default fast path: bf16 matmuls with f32 accumulation (relaxed tolerance).
    out = jax.block_until_ready(conditional_discriminator(image, label, params))
    assert out.shape == (B, 1)
    assert bool(jnp.all(jnp.isfinite(out)))
    assert jnp.allclose(out, ref, atol=5e-2, rtol=5e-2)

    # Bit-accurate f32 path (tight tolerance).
    out_f32 = jax.block_until_ready(
        conditional_discriminator(image, label, params,
                                  compute_dtype=jnp.float32))
    assert jnp.allclose(out_f32, ref, atol=1e-5, rtol=1e-5)

    print("KERNEL_OK")
</pallas_src>

<mosaic_0001>
module attributes {stable_mosaic.version = 11 : i64} {
  func.func @_disc_kernel(%arg0: i32, %arg1: memref<8x896xbf16, #tpu.memory_space<vmem>>, %arg2: memref<1x1x8xf32, #tpu.memory_space<vmem>>, %arg3: memref<896x256xbf16, #tpu.memory_space<vmem>>, %arg4: memref<1x256xf32, #tpu.memory_space<vmem>>, %arg5: memref<256x128xbf16, #tpu.memory_space<vmem>>, %arg6: memref<1x128xf32, #tpu.memory_space<vmem>>, %arg7: memref<1x128xf32, #tpu.memory_space<vmem>>, %arg8: memref<1x1x8xf32, #tpu.memory_space<vmem>>) attributes {dimension_semantics = [#tpu.dimension_semantics<parallel>], iteration_bounds = array<i64: 1>, scalar_prefetch = 0 : i64, scratch_operands = 0 : i64, tpu.core_type = #tpu.core_type<tc>, window_params = [{transform_indices = @transform_0, window_bounds = array<i64: 8, 896>}, {transform_indices = @transform_1, window_bounds = array<i64: 1, 1, 8>}, {pipeline_mode = #tpu.pipeline_mode<synchronous>, transform_indices = @transform_2, window_bounds = array<i64: 896, 256>}, {pipeline_mode = #tpu.pipeline_mode<synchronous>, transform_indices = @transform_3, window_bounds = array<i64: 1, 256>}, {pipeline_mode = #tpu.pipeline_mode<synchronous>, transform_indices = @transform_4, window_bounds = array<i64: 256, 128>}, {pipeline_mode = #tpu.pipeline_mode<synchronous>, transform_indices = @transform_5, window_bounds = array<i64: 1, 128>}, {pipeline_mode = #tpu.pipeline_mode<synchronous>, transform_indices = @transform_6, window_bounds = array<i64: 1, 128>}, {transform_indices = @transform_7, window_bounds = array<i64: 1, 1, 8>}]} {
    %c0 = arith.constant 0 : index
    %c0_0 = arith.constant 0 : index
    %0 = vector.load %arg1[%c0, %c0_0] : memref<8x896xbf16, #tpu.memory_space<vmem>>, vector<8x896xbf16>
    %c0_1 = arith.constant 0 : index
    %c0_2 = arith.constant 0 : index
    %1 = vector.load %arg3[%c0_1, %c0_2] : memref<896x256xbf16, #tpu.memory_space<vmem>>, vector<896x256xbf16>
    %cst = arith.constant dense<0.000000e+00> : vector<8x256xf32>
    %2 = tpu.matmul %0, %1, %cst {dimension_numbers = #tpu.dot_dimension_numbers<[1], [0], [0], [1], [0, 0, 1, 1], [], []>} : vector<8x896xbf16>, vector<896x256xbf16>, vector<8x256xf32> -> vector<8x256xf32>
    %c0_3 = arith.constant 0 : index
    %c0_4 = arith.constant 0 : index
    %3 = vector.load %arg4[%c0_3, %c0_4] : memref<1x256xf32, #tpu.memory_space<vmem>>, vector<1x256xf32>
    %4 = vector.broadcast %3 : vector<1x256xf32> to vector<8x256xf32>
    %5 = arith.addf %2, %4 : vector<8x256xf32>
    %cst_5 = arith.constant 0.000000e+00 : f32
    %6 = vector.broadcast %cst_5 : f32 to vector<8x256xf32>
    %7 = arith.cmpf ogt, %5, %6 : vector<8x256xf32>
    %cst_6 = arith.constant 2.000000e-01 : f32
    %8 = vector.broadcast %cst_6 : f32 to vector<8x256xf32>
    %9 = arith.mulf %8, %5 : vector<8x256xf32>
    %10 = arith.select %7, %5, %9 : vector<8x256xi1>, vector<8x256xf32>
    %11 = arith.truncf %10 : vector<8x256xf32> to vector<8x256xbf16>
    %c0_7 = arith.constant 0 : index
    %c0_8 = arith.constant 0 : index
    %12 = vector.load %arg5[%c0_7, %c0_8] : memref<256x128xbf16, #tpu.memory_space<vmem>>, vector<256x128xbf16>
    %cst_9 = arith.constant dense<0.000000e+00> : vector<8x128xf32>
    %13 = tpu.matmul %11, %12, %cst_9 {dimension_numbers = #tpu.dot_dimension_numbers<[1], [0], [0], [1], [0, 0, 1, 1], [], []>} : vector<8x256xbf16>, vector<256x128xbf16>, vector<8x128xf32> -> vector<8x128xf32>
    %c0_10 = arith.constant 0 : index
    %c0_11 = arith.constant 0 : index
    %14 = vector.load %arg6[%c0_10, %c0_11] : memref<1x128xf32, #tpu.memory_space<vmem>>, vector<1x128xf32>
    %15 = vector.broadcast %14 : vector<1x128xf32> to vector<8x128xf32>
    %16 = arith.addf %13, %15 : vector<8x128xf32>
    %cst_12 = arith.constant 0.000000e+00 : f32
    %17 = vector.broadcast %cst_12 : f32 to vector<8x128xf32>
    %18 = arith.cmpf ogt, %16, %17 : vector<8x128xf32>
    %cst_13 = arith.constant 2.000000e-01 : f32
    %19 = vector.broadcast %cst_13 : f32 to vector<8x128xf32>
    %20 = arith.mulf %19, %16 : vector<8x128xf32>
    %21 = arith.select %18, %16, %20 : vector<8x128xi1>, vector<8x128xf32>
    %c0_14 = arith.constant 0 : index
    %c0_15 = arith.constant 0 : index
    %22 = vector.load %arg7[%c0_14, %c0_15] : memref<1x128xf32, #tpu.memory_space<vmem>>, vector<1x128xf32>
    %cst_16 = arith.constant dense<0.000000e+00> : vector<1x8xf32>
    %23 = tpu.matmul %22, %21, %cst_16 {dimension_numbers = #tpu.dot_dimension_numbers<[1], [1], [0], [0], [0, 0, 1, 0], [], []>} : vector<1x128xf32>, vector<8x128xf32>, vector<1x8xf32> -> vector<1x8xf32>
    %c0_17 = arith.constant 0 : index
    %c0_18 = arith.constant 0 : index
    %c0_19 = arith.constant 0 : index
    %24 = vector.load %arg2[%c0_17, %c0_18, %c0_19] : memref<1x1x8xf32, #tpu.memory_space<vmem>>, vector<1x1x8xf32>
    %25 = vector.shape_cast %24 : vector<1x1x8xf32> to vector<1x8xf32>
    %26 = arith.addf %23, %25 : vector<1x8xf32>
    %27 = arith.negf %26 : vector<1x8xf32>
    %28 = math.exp %27 : vector<1x8xf32>
    %cst_20 = arith.constant 1.000000e+00 : f32
    %29 = vector.broadcast %cst_20 : f32 to vector<1x8xf32>
    %30 = arith.addf %29, %28 : vector<1x8xf32>
    %31 = arith.divf %29, %30 : vector<1x8xf32>
    %c0_21 = arith.constant 0 : index
    %c0_22 = arith.constant 0 : index
    %c0_23 = arith.constant 0 : index
    %32 = vector.load %arg8[%c0_21, %c0_22, %c0_23] : memref<1x1x8xf32, #tpu.memory_space<vmem>>, vector<1x1x8xf32>
    %33 = vector.shape_cast %32 : vector<1x1x8xf32> to vector<1x8xf32>
    %34 = vector.shape_cast %31 : vector<1x8xf32> to vector<1x1x8xf32>
    tpu.vector_store %arg8[%c0_21, %c0_22, %c0_23], %34 {strides = array<i32>} : memref<1x1x8xf32, #tpu.memory_space<vmem>>, vector<1x1x8xf32>,
    return
  }
  func.func @transform_0(%arg0: i32) -> (i32, i32) {
    %c0_i32 = arith.constant 0 : i32
    %c0_i32_0 = arith.constant 0 : i32
    return %arg0, %c0_i32 : i32, i32
  }
  func.func @transform_1(%arg0: i32) -> (i32, i32, i32) {
    %c0_i32 = arith.constant 0 : i32
    %c0_i32_0 = arith.constant 0 : i32
    %c0_i32_1 = arith.constant 0 : i32
    return %arg0, %c0_i32, %c0_i32_0 : i32, i32, i32
  }
  func.func @transform_2(%arg0: i32) -> (i32, i32) {
    %c0_i32 = arith.constant 0 : i32
    %c0_i32_0 = arith.constant 0 : i32
    %c0_i32_1 = arith.constant 0 : i32
    return %c0_i32, %c0_i32_0 : i32, i32
  }
  func.func @transform_3(%arg0: i32) -> (i32, i32) {
    %c0_i32 = arith.constant 0 : i32
    %c0_i32_0 = arith.constant 0 : i32
    %c0_i32_1 = arith.constant 0 : i32
    return %c0_i32, %c0_i32_0 : i32, i32
  }
  func.func @transform_4(%arg0: i32) -> (i32, i32) {
    %c0_i32 = arith.constant 0 : i32
    %c0_i32_0 = arith.constant 0 : i32
    %c0_i32_1 = arith.constant 0 : i32
    return %c0_i32, %c0_i32_0 : i32, i32
  }
  func.func @transform_5(%arg0: i32) -> (i32, i32) {
    %c0_i32 = arith.constant 0 : i32
    %c0_i32_0 = arith.constant 0 : i32
    %c0_i32_1 = arith.constant 0 : i32
    return %c0_i32, %c0_i32_0 : i32, i32
  }
  func.func @transform_6(%arg0: i32) -> (i32, i32) {
    %c0_i32 = arith.constant 0 : i32
    %c0_i32_0 = arith.constant 0 : i32
    %c0_i32_1 = arith.constant 0 : i32
    return %c0_i32, %c0_i32_0 : i32, i32
  }
  func.func @transform_7(%arg0: i32) -> (i32, i32, i32) {
    %c0_i32 = arith.constant 0 : i32
    %c0_i32_0 = arith.constant 0 : i32
    %c0_i32_1 = arith.constant 0 : i32
    return %arg0, %c0_i32, %c0_i32_0 : i32, i32, i32
  }
}

</mosaic_0001>

<llo_original>
// kernel: conditional_discriminator.1
$region0: #{conditional_discriminator.1}
  #allocation0 [shape = 'u32[]', space=smem, size = 0x4, offset = 0x4, fixed_abs, tag = 'smem constant byte address 0x4 - core index']
  #allocation1 [shape = 'u32[144,128]{1,0:T(1,128)}', space=vmem, size = 0x12000, scoped, tag = 'internal scratch']
  %s0 = inlined_call_operand.vmem [shape: bf16[8,896], index: 0, kind: input, shape index: {}]
  %s1 = inlined_call_operand.vmem [shape: f32[1,1,8], index: 1, kind: input, shape index: {}]
  %s2 = inlined_call_operand.vmem [shape: bf16[896,256], index: 2, kind: input, shape index: {}]
  %s3 = inlined_call_operand.vmem [shape: f32[1,256], index: 3, kind: input, shape index: {}]
  %s4 = inlined_call_operand.vmem [shape: bf16[256,128], index: 4, kind: input, shape index: {}]
  %s5 = inlined_call_operand.vmem [shape: f32[1,128], index: 5, kind: input, shape index: {}]
  %s6 = inlined_call_operand.vmem [shape: f32[1,128], index: 6, kind: input, shape index: {}]
  %s7 = inlined_call_operand.hbm [shape: f32[1,1,8], index: 7, kind: output, shape index: {}]
  %s8 = sld [smem:[#allocation0]]
  $region38: #{conditional_discriminator.1} parent=0
    _
  %s10 = ssub.s32 1, %s8
  %s11 = scalar_select 0, %s10, %s8
  $region1: #{conditional_discriminator.1} parent=0
    #allocation2 [shape = 'u8[512]{0}', space=vmem, size = 0x400, scoped, tag = 'output window, operand 0, single buffered']
    #allocation3 [shape = 's32[1]{0}', space=sflag, size = 0x4, scoped, tag = 'scoped memory for conditional_discriminator.1']
    %12 = vsyncpa [#allocation3], 0
    // Predicated region
    $region2: #{conditional_discriminator.1} parent=1 // pred_check
      _
    $region3: #{conditional_discriminator.1} parent=1 // pred_check_branch
      %14 = sbr.rel (0) target = $region5
    $region4: #{conditional_discriminator.1} parent=1 // pred_region
      _
    $region5: #{conditional_discriminator.1} parent=1 // pred_fallthru
      _
    // Predicated region
    $region6: #{conditional_discriminator.1} parent=1 // pred_check
      _
    $region7: #{conditional_discriminator.1} parent=1 // pred_check_branch
      %16 = sbr.rel (0) target = $region9
    $region8: #{conditional_discriminator.1} parent=1 // pred_region
      _
    $region9: #{conditional_discriminator.1} parent=1 // pred_fallthru
      _
    // Predicated region
    $region10: #{conditional_discriminator.1} parent=1 // pred_check
      _
    $region11: #{conditional_discriminator.1} parent=1 // pred_check_branch
      %18 = sbr.rel (0) target = $region13
    $region12: #{conditional_discriminator.1} parent=1 // pred_region
      _
    $region13: #{conditional_discriminator.1} parent=1 // pred_fallthru
      _
    // Predicated region
    $region14: #{conditional_discriminator.1} parent=1 // pred_check
      _
    $region15: #{conditional_discriminator.1} parent=1 // pred_check_branch
      %20 = sbr.rel (0) target = $region17
    $region16: #{conditional_discriminator.1} parent=1 // pred_region
      _
    $region17: #{conditional_discriminator.1} parent=1 // pred_fallthru
      _
    // Predicated region
    $region18: #{conditional_discriminator.1} parent=1 // pred_check
      _
    $region19: #{conditional_discriminator.1} parent=1 // pred_check_branch
      %22 = sbr.rel (0) target = $region21
    $region20: #{conditional_discriminator.1} parent=1 // pred_region
      _
    $region21: #{conditional_discriminator.1} parent=1 // pred_fallthru
      _
    // Predicated region
    $region22: #{conditional_discriminator.1} parent=1 // pred_check
      _
    $region23: #{conditional_discriminator.1} parent=1 // pred_check_branch
      %24 = sbr.rel (0) target = $region25
    $region24: #{conditional_discriminator.1} parent=1 // pred_region
      _
    $region25: #{conditional_discriminator.1} parent=1 // pred_fallthru
      _
    // Predicated region
    $region26: #{conditional_discriminator.1} parent=1 // pred_check
      _
    $region27: #{conditional_discriminator.1} parent=1 // pred_check_branch
      %26 = sbr.rel (0) target = $region29
    $region28: #{conditional_discriminator.1} parent=1 // pred_region
      _
    $region29: #{conditional_discriminator.1} parent=1 // pred_fallthru
      _
    %v28 = vld [vmem:[%s0] sm:$0xff]
    %v29 = vld [vmem:[%s0 + $0x8] sm:$0xff]
    %v30 = vld [vmem:[%s0 + $0x10] sm:$0xff]
    %v31 = vld [vmem:[%s0 + $0x18] sm:$0xf]
    %v32 = vld [vmem:[%s2] sm:$0xff]
    %v33 = vld [vmem:[%s2 + $0x8] sm:$0xff]
    %v34 = vld [vmem:[%s2 + $0x10] sm:$0xff]
    %v35 = vld [vmem:[%s2 + $0x18] sm:$0xff]
    %v36 = vld [vmem:[%s2 + $0x20] sm:$0xff]
    %v37 = vld [vmem:[%s2 + $0x28] sm:$0xff]
    %v38 = vld [vmem:[%s2 + $0x30] sm:$0xff]
    %v39 = vld [vmem:[%s2 + $0x38] sm:$0xff]
    %v40 = vld [vmem:[%s2 + $0x40] sm:$0xff]
    %v41 = vld [vmem:[%s2 + $0x48] sm:$0xff]
    %v42 = vld [vmem:[%s2 + $0x50] sm:$0xff]
    %v43 = vld [vmem:[%s2 + $0x58] sm:$0xff]
    %v44 = vld [vmem:[%s2 + $0x60] sm:$0xff]
    %v45 = vld [vmem:[%s2 + $0x68] sm:$0xff]
    %v46 = vld [vmem:[%s2 + $0x70] sm:$0xff]
    %v47 = vld [vmem:[%s2 + $0x78] sm:$0xff]
    %v48 = vld [vmem:[%s2 + $0x80] sm:$0xff]
    %v49 = vld [vmem:[%s2 + $0x88] sm:$0xff]
    %v50 = vld [vmem:[%s2 + $0x90] sm:$0xff]
    %v51 = vld [vmem:[%s2 + $0x98] sm:$0xff]
    %v52 = vld [vmem:[%s2 + $0xa0] sm:$0xff]
    %v53 = vld [vmem:[%s2 + $0xa8] sm:$0xff]
    %v54 = vld [vmem:[%s2 + $0xb0] sm:$0xff]
    %v55 = vld [vmem:[%s2 + $0xb8] sm:$0xff]
    %v56 = vld [vmem:[%s2 + $0xc0] sm:$0xff]
    %v57 = vld [vmem:[%s2 + $0xc8] sm:$0xff]
    %v58 = vld [vmem:[%s2 + $0xd0] sm:$0xff]
    %v59 = vld [vmem:[%s2 + $0xd8] sm:$0xff]
    %v60 = vld [vmem:[%s2 + $0xe0] sm:$0xff]
    %v61 = vld [vmem:[%s2 + $0xe8] sm:$0xff]
    %v62 = vld [vmem:[%s2 + $0xf0] sm:$0xff]
    %v63 = vld [vmem:[%s2 + $0xf8] sm:$0xff]
    %v64 = vld [vmem:[%s2 + $0x100] sm:$0xff]
    %v65 = vld [vmem:[%s2 + $0x108] sm:$0xff]
    %v66 = vld [vmem:[%s2 + $0x110] sm:$0xff]
    %v67 = vld [vmem:[%s2 + $0x118] sm:$0xff]
    %v68 = vld [vmem:[%s2 + $0x120] sm:$0xff]
    %v69 = vld [vmem:[%s2 + $0x128] sm:$0xff]
    %v70 = vld [vmem:[%s2 + $0x130] sm:$0xff]
    %v71 = vld [vmem:[%s2 + $0x138] sm:$0xff]
    %v72 = vld [vmem:[%s2 + $0x140] sm:$0xff]
    %v73 = vld [vmem:[%s2 + $0x148] sm:$0xff]
    %v74 = vld [vmem:[%s2 + $0x150] sm:$0xff]
    %v75 = vld [vmem:[%s2 + $0x158] sm:$0xff]
    %v76 = vld [vmem:[%s2 + $0x160] sm:$0xff]
    %v77 = vld [vmem:[%s2 + $0x168] sm:$0xff]
    %v78 = vld [vmem:[%s2 + $0x170] sm:$0xff]
    %v79 = vld [vmem:[%s2 + $0x178] sm:$0xff]
    %v80 = vld [vmem:[%s2 + $0x180] sm:$0xff]
    %v81 = vld [vmem:[%s2 + $0x188] sm:$0xff]
    %v82 = vld [vmem:[%s2 + $0x190] sm:$0xff]
    %v83 = vld [vmem:[%s2 + $0x198] sm:$0xff]
    %v84 = vld [vmem:[%s2 + $0x1a0] sm:$0xff]
    %v85 = vld [vmem:[%s2 + $0x1a8] sm:$0xff]
    %v86 = vld [vmem:[%s2 + $0x1b0] sm:$0xff]
    %v87 = vld [vmem:[%s2 + $0x1b8] sm:$0xff]
    %v88 = vld [vmem:[%s2 + $0x1c0] sm:$0xff]
    %v89 = vld [vmem:[%s2 + $0x1c8] sm:$0xff]
    %v90 = vld [vmem:[%s2 + $0x1d0] sm:$0xff]
    %v91 = vld [vmem:[%s2 + $0x1d8] sm:$0xff]
    %v92 = vld [vmem:[%s2 + $0x1e0] sm:$0xff]
    %v93 = vld [vmem:[%s2 + $0x1e8] sm:$0xff]
    %v94 = vld [vmem:[%s2 + $0x1f0] sm:$0xff]
    %v95 = vld [vmem:[%s2 + $0x1f8] sm:$0xff]
    %v96 = vld [vmem:[%s2 + $0x200] sm:$0xff]
    %v97 = vld [vmem:[%s2 + $0x208] sm:$0xff]
    %v98 = vld [vmem:[%s2 + $0x210] sm:$0xff]
    %v99 = vld [vmem:[%s2 + $0x218] sm:$0xff]
    %v100 = vld [vmem:[%s2 + $0x220] sm:$0xff]
    %v101 = vld [vmem:[%s2 + $0x228] sm:$0xff]
    %v102 = vld [vmem:[%s2 + $0x230] sm:$0xff]
    %v103 = vld [vmem:[%s2 + $0x238] sm:$0xff]
    %v104 = vld [vmem:[%s2 + $0x240] sm:$0xff]
    %v105 = vld [vmem:[%s2 + $0x248] sm:$0xff]
    %v106 = vld [vmem:[%s2 + $0x250] sm:$0xff]
    %v107 = vld [vmem:[%s2 + $0x258] sm:$0xff]
    %v108 = vld [vmem:[%s2 + $0x260] sm:$0xff]
    %v109 = vld [vmem:[%s2 + $0x268] sm:$0xff]
    %v110 = vld [vmem:[%s2 + $0x270] sm:$0xff]
    %v111 = vld [vmem:[%s2 + $0x278] sm:$0xff]
    %v112 = vld [vmem:[%s2 + $0x280] sm:$0xff]
    %v113 = vld [vmem:[%s2 + $0x288] sm:$0xff]
    %v114 = vld [vmem:[%s2 + $0x290] sm:$0xff]
    %v115 = vld [vmem:[%s2 + $0x298] sm:$0xff]
    %v116 = vld [vmem:[%s2 + $0x2a0] sm:$0xff]
    %v117 = vld [vmem:[%s2 + $0x2a8] sm:$0xff]
    %v118 = vld [vmem:[%s2 + $0x2b0] sm:$0xff]
    %v119 = vld [vmem:[%s2 + $0x2b8] sm:$0xff]
    %v120 = vld [vmem:[%s2 + $0x2c0] sm:$0xff]
    %v121 = vld [vmem:[%s2 + $0x2c8] sm:$0xff]
    %v122 = vld [vmem:[%s2 + $0x2d0] sm:$0xff]
    %v123 = vld [vmem:[%s2 + $0x2d8] sm:$0xff]
    %v124 = vld [vmem:[%s2 + $0x2e0] sm:$0xff]
    %v125 = vld [vmem:[%s2 + $0x2e8] sm:$0xff]
    %v126 = vld [vmem:[%s2 + $0x2f0] sm:$0xff]
    %v127 = vld [vmem:[%s2 + $0x2f8] sm:$0xff]
    %v128 = vld [vmem:[%s2 + $0x300] sm:$0xff]
    %v129 = vld [vmem:[%s2 + $0x308] sm:$0xff]
    %v130 = vld [vmem:[%s2 + $0x310] sm:$0xff]
    %v131 = vld [vmem:[%s2 + $0x318] sm:$0xff]
    %v132 = vld [vmem:[%s2 + $0x320] sm:$0xff]
    %v133 = vld [vmem:[%s2 + $0x328] sm:$0xff]
    %v134 = vld [vmem:[%s2 + $0x330] sm:$0xff]
    %v135 = vld [vmem:[%s2 + $0x338] sm:$0xff]
    %v136 = vld [vmem:[%s2 + $0x340] sm:$0xff]
    %v137 = vld [vmem:[%s2 + $0x348] sm:$0xff]
    %v138 = vld [vmem:[%s2 + $0x350] sm:$0xff]
    %v139 = vld [vmem:[%s2 + $0x358] sm:$0xff]
    %v140 = vld [vmem:[%s2 + $0x360] sm:$0xff]
    %v141 = vld [vmem:[%s2 + $0x368] sm:$0xff]
    %v142 = vld [vmem:[%s2 + $0x370] sm:$0xff]
    %v143 = vld [vmem:[%s2 + $0x378] sm:$0xff]
    %v144 = vld [vmem:[%s3] sm:$0x3]
    %v146 = vlaneseq
    %v147 = vshrl.u32 %v146, 7
    %v148 = vsub.s32 0, %v147
    %v149 = vrot.slane %v144, %v148
    %v150 = vlaneseq
    %v151 = vshrl.u32 %v150, 7
    %v152 = vsub.s32 1, %v151
    %v153 = vrot.slane %v144, %v152
    %v160 = vunpack.c.l.b16 %v28
    %v161 = vunpack.c.h.b16 %v28
    %v162 = vunpack.c.l.b16 %v29
    %v163 = vunpack.c.h.b16 %v29
    %v164 = vunpack.c.l.b16 %v30
    %v165 = vunpack.c.h.b16 %v30
    %v166 = vunpack.c.l.b16 %v31
    %v167 = vpack.c.b16 %v160, %v160
    %v168 = vpack.c.b16 %v161, %v161
    %v169 = vpack.c.b16 %v162, %v162
    %v170 = vpack.c.b16 %v163, %v163
    %v171 = vpack.c.b16 %v164, %v164
    %v172 = vpack.c.b16 %v165, %v165
    %v173 = vpack.c.b16 %v166, %v166
    %v293 = vunpack.c.l.b16 %v32
    %v294 = vunpack.c.h.b16 %v32
    %v295 = vunpack.c.l.b16 %v33
    %v296 = vunpack.c.h.b16 %v33
    %v297 = vunpack.c.l.b16 %v34
    %v298 = vunpack.c.h.b16 %v34
    %v299 = vunpack.c.l.b16 %v35
    %v300 = vunpack.c.h.b16 %v35
    %v301 = vunpack.c.l.b16 %v36
    %v302 = vunpack.c.h.b16 %v36
    %v303 = vunpack.c.l.b16 %v37
    %v304 = vunpack.c.h.b16 %v37
    %v305 = vunpack.c.l.b16 %v38
    %v306 = vunpack.c.h.b16 %v38
    %v307 = vunpack.c.l.b16 %v39
    %v308 = vunpack.c.h.b16 %v39
    %v309 = vunpack.c.l.b16 %v40
    %v310 = vunpack.c.h.b16 %v40
    %v311 = vunpack.c.l.b16 %v41
    %v312 = vunpack.c.h.b16 %v41
    %v313 = vunpack.c.l.b16 %v42
    %v314 = vunpack.c.h.b16 %v42
    %v315 = vunpack.c.l.b16 %v43
    %v316 = vunpack.c.h.b16 %v43
    %v317 = vunpack.c.l.b16 %v44
    %v318 = vunpack.c.h.b16 %v44
    %v319 = vunpack.c.l.b16 %v45
    %v320 = vunpack.c.h.b16 %v45
    %v321 = vunpack.c.l.b16 %v46
    %v322 = vunpack.c.h.b16 %v46
    %v323 = vunpack.c.l.b16 %v47
    %v324 = vunpack.c.h.b16 %v47
    %v325 = vunpack.c.l.b16 %v48
    %v326 = vunpack.c.h.b16 %v48
    %v327 = vunpack.c.l.b16 %v49
    %v328 = vunpack.c.h.b16 %v49
    %v329 = vunpack.c.l.b16 %v50
    %v330 = vunpack.c.h.b16 %v50
    %v331 = vunpack.c.l.b16 %v51
    %v332 = vunpack.c.h.b16 %v51
    %v333 = vunpack.c.l.b16 %v52
    %v334 = vunpack.c.h.b16 %v52
    %v335 = vunpack.c.l.b16 %v53
    %v336 = vunpack.c.h.b16 %v53
    %v337 = vunpack.c.l.b16 %v54
    %v338 = vunpack.c.h.b16 %v54
    %v339 = vunpack.c.l.b16 %v55
    %v340 = vunpack.c.h.b16 %v55
    %v341 = vunpack.c.l.b16 %v56
    %v342 = vunpack.c.h.b16 %v56
    %v343 = vunpack.c.l.b16 %v57
    %v344 = vunpack.c.h.b16 %v57
    %v345 = vunpack.c.l.b16 %v58
    %v346 = vunpack.c.h.b16 %v58
    %v347 = vunpack.c.l.b16 %v59
    %v348 = vunpack.c.h.b16 %v59
    %v349 = vunpack.c.l.b16 %v60
    %v350 = vunpack.c.h.b16 %v60
    %v351 = vunpack.c.l.b16 %v61
    %v352 = vunpack.c.h.b16 %v61
    %v353 = vunpack.c.l.b16 %v62
    %v354 = vunpack.c.h.b16 %v62
    %v355 = vunpack.c.l.b16 %v63
    %v356 = vunpack.c.h.b16 %v63
    %v357 = vunpack.c.l.b16 %v64
    %v358 = vunpack.c.h.b16 %v64
    %v359 = vunpack.c.l.b16 %v65
    %v360 = vunpack.c.h.b16 %v65
    %v361 = vunpack.c.l.b16 %v66
    %v362 = vunpack.c.h.b16 %v66
    %v363 = vunpack.c.l.b16 %v67
    %v364 = vunpack.c.h.b16 %v67
    %v365 = vunpack.c.l.b16 %v68
    %v366 = vunpack.c.h.b16 %v68
    %v367 = vunpack.c.l.b16 %v69
    %v368 = vunpack.c.h.b16 %v69
    %v369 = vunpack.c.l.b16 %v70
    %v370 = vunpack.c.h.b16 %v70
    %v371 = vunpack.c.l.b16 %v71
    %v372 = vunpack.c.h.b16 %v71
    %v373 = vunpack.c.l.b16 %v72
    %v374 = vunpack.c.h.b16 %v72
    %v375 = vunpack.c.l.b16 %v73
    %v376 = vunpack.c.h.b16 %v73
    %v377 = vunpack.c.l.b16 %v74
    %v378 = vunpack.c.h.b16 %v74
    %v379 = vunpack.c.l.b16 %v75
    %v380 = vunpack.c.h.b16 %v75
    %v381 = vunpack.c.l.b16 %v76
    %v382 = vunpack.c.h.b16 %v76
    %v383 = vunpack.c.l.b16 %v77
    %v384 = vunpack.c.h.b16 %v77
    %v385 = vunpack.c.l.b16 %v78
    %v386 = vunpack.c.h.b16 %v78
    %v387 = vunpack.c.l.b16 %v79
    %v388 = vunpack.c.h.b16 %v79
    %v389 = vunpack.c.l.b16 %v80
    %v390 = vunpack.c.h.b16 %v80
    %v391 = vunpack.c.l.b16 %v81
    %v392 = vunpack.c.h.b16 %v81
    %v393 = vunpack.c.l.b16 %v82
    %v394 = vunpack.c.h.b16 %v82
    %v395 = vunpack.c.l.b16 %v83
    %v396 = vunpack.c.h.b16 %v83
    %v397 = vunpack.c.l.b16 %v84
    %v398 = vunpack.c.h.b16 %v84
    %v399 = vunpack.c.l.b16 %v85
    %v400 = vunpack.c.h.b16 %v85
    %v401 = vunpack.c.l.b16 %v86
    %v402 = vunpack.c.h.b16 %v86
    %v403 = vunpack.c.l.b16 %v87
    %v404 = vunpack.c.h.b16 %v87
    %v405 = vunpack.c.l.b16 %v88
    %v406 = vunpack.c.h.b16 %v88
    %v407 = vunpack.c.l.b16 %v89
    %v408 = vunpack.c.h.b16 %v89
    %v409 = vunpack.c.l.b16 %v90
    %v410 = vunpack.c.h.b16 %v90
    %v411 = vunpack.c.l.b16 %v91
    %v412 = vunpack.c.h.b16 %v91
    %v413 = vunpack.c.l.b16 %v92
    %v414 = vunpack.c.h.b16 %v92
    %v415 = vunpack.c.l.b16 %v93
    %v416 = vunpack.c.h.b16 %v93
    %v417 = vunpack.c.l.b16 %v94
    %v418 = vunpack.c.h.b16 %v94
    %v419 = vunpack.c.l.b16 %v95
    %v420 = vunpack.c.h.b16 %v95
    %v421 = vunpack.c.l.b16 %v96
    %v422 = vunpack.c.h.b16 %v96
    %v423 = vunpack.c.l.b16 %v97
    %v424 = vunpack.c.h.b16 %v97
    %v425 = vunpack.c.l.b16 %v98
    %v426 = vunpack.c.h.b16 %v98
    %v427 = vunpack.c.l.b16 %v99
    %v428 = vunpack.c.h.b16 %v99
    %v429 = vunpack.c.l.b16 %v100
    %v430 = vunpack.c.h.b16 %v100
    %v431 = vunpack.c.l.b16 %v101
    %v432 = vunpack.c.h.b16 %v101
    %v433 = vunpack.c.l.b16 %v102
    %v434 = vunpack.c.h.b16 %v102
    %v435 = vunpack.c.l.b16 %v103
    %v436 = vunpack.c.h.b16 %v103
    %v437 = vunpack.c.l.b16 %v104
    %v438 = vunpack.c.h.b16 %v104
    %v439 = vunpack.c.l.b16 %v105
    %v440 = vunpack.c.h.b16 %v105
    %v441 = vunpack.c.l.b16 %v106
    %v442 = vunpack.c.h.b16 %v106
    %v443 = vunpack.c.l.b16 %v107
    %v444 = vunpack.c.h.b16 %v107
    %v445 = vunpack.c.l.b16 %v108
    %v446 = vunpack.c.h.b16 %v108
    %v447 = vunpack.c.l.b16 %v109
    %v448 = vunpack.c.h.b16 %v109
    %v449 = vunpack.c.l.b16 %v110
    %v450 = vunpack.c.h.b16 %v110
    %v451 = vunpack.c.l.b16 %v111
    %v452 = vunpack.c.h.b16 %v111
    %v453 = vunpack.c.l.b16 %v112
    %v454 = vunpack.c.h.b16 %v112
    %v455 = vunpack.c.l.b16 %v113
    %v456 = vunpack.c.h.b16 %v113
    %v457 = vunpack.c.l.b16 %v114
    %v458 = vunpack.c.h.b16 %v114
    %v459 = vunpack.c.l.b16 %v115
    %v460 = vunpack.c.h.b16 %v115
    %v461 = vunpack.c.l.b16 %v116
    %v462 = vunpack.c.h.b16 %v116
    %v463 = vunpack.c.l.b16 %v117
    %v464 = vunpack.c.h.b16 %v117
    %v465 = vunpack.c.l.b16 %v118
    %v466 = vunpack.c.h.b16 %v118
    %v467 = vunpack.c.l.b16 %v119
    %v468 = vunpack.c.h.b16 %v119
    %v469 = vunpack.c.l.b16 %v120
    %v470 = vunpack.c.h.b16 %v120
    %v471 = vunpack.c.l.b16 %v121
    %v472 = vunpack.c.h.b16 %v121
    %v473 = vunpack.c.l.b16 %v122
    %v474 = vunpack.c.h.b16 %v122
    %v475 = vunpack.c.l.b16 %v123
    %v476 = vunpack.c.h.b16 %v123
    %v477 = vunpack.c.l.b16 %v124
    %v478 = vunpack.c.h.b16 %v124
    %v479 = vunpack.c.l.b16 %v125
    %v480 = vunpack.c.h.b16 %v125
    %v481 = vunpack.c.l.b16 %v126
    %v482 = vunpack.c.h.b16 %v126
    %v483 = vunpack.c.l.b16 %v127
    %v484 = vunpack.c.h.b16 %v127
    %v485 = vunpack.c.l.b16 %v128
    %v486 = vunpack.c.h.b16 %v128
    %v487 = vunpack.c.l.b16 %v129
    %v488 = vunpack.c.h.b16 %v129
    %v489 = vunpack.c.l.b16 %v130
    %v490 = vunpack.c.h.b16 %v130
    %v491 = vunpack.c.l.b16 %v131
    %v492 = vunpack.c.h.b16 %v131
    %v493 = vunpack.c.l.b16 %v132
    %v494 = vunpack.c.h.b16 %v132
    %v495 = vunpack.c.l.b16 %v133
    %v496 = vunpack.c.h.b16 %v133
    %v497 = vunpack.c.l.b16 %v134
    %v498 = vunpack.c.h.b16 %v134
    %v499 = vunpack.c.l.b16 %v135
    %v500 = vunpack.c.h.b16 %v135
    %v501 = vunpack.c.l.b16 %v136
    %v502 = vunpack.c.h.b16 %v136
    %v503 = vunpack.c.l.b16 %v137
    %v504 = vunpack.c.h.b16 %v137
    %v505 = vunpack.c.l.b16 %v138
    %v506 = vunpack.c.h.b16 %v138
    %v507 = vunpack.c.l.b16 %v139
    %v508 = vunpack.c.h.b16 %v139
    %v509 = vunpack.c.l.b16 %v140
    %v510 = vunpack.c.h.b16 %v140
    %v511 = vunpack.c.l.b16 %v141
    %v512 = vunpack.c.h.b16 %v141
    %v513 = vunpack.c.l.b16 %v142
    %v514 = vunpack.c.h.b16 %v142
    %v515 = vunpack.c.l.b16 %v143
    %v516 = vunpack.c.h.b16 %v143
    %v517 = vpack.c.b16 %v295, %v293
    %v518 = vpack.c.b16 %v296, %v294
    %v519 = vpack.c.b16 %v299, %v297
    %v520 = vpack.c.b16 %v300, %v298
    %v521 = vpack.c.b16 %v303, %v301
    %v522 = vpack.c.b16 %v304, %v302
    %v523 = vpack.c.b16 %v307, %v305
    %v524 = vpack.c.b16 %v308, %v306
    %v525 = vpack.c.b16 %v311, %v309
    %v526 = vpack.c.b16 %v312, %v310
    %v527 = vpack.c.b16 %v315, %v313
    %v528 = vpack.c.b16 %v316, %v314
    %v529 = vpack.c.b16 %v319, %v317
    %v530 = vpack.c.b16 %v320, %v318
    %v531 = vpack.c.b16 %v323, %v321
    %v532 = vpack.c.b16 %v324, %v322
    %v533 = vpack.c.b16 %v327, %v325
    %v534 = vpack.c.b16 %v328, %v326
    %v535 = vpack.c.b16 %v331, %v329
    %v536 = vpack.c.b16 %v332, %v330
    %v537 = vpack.c.b16 %v335, %v333
    %v538 = vpack.c.b16 %v336, %v334
    %v539 = vpack.c.b16 %v339, %v337
    %v540 = vpack.c.b16 %v340, %v338
    %v541 = vpack.c.b16 %v343, %v341
    %v542 = vpack.c.b16 %v344, %v342
    %v543 = vpack.c.b16 %v347, %v345
    %v544 = vpack.c.b16 %v348, %v346
    %v545 = vpack.c.b16 %v351, %v349
    %v546 = vpack.c.b16 %v352, %v350
    %v547 = vpack.c.b16 %v355, %v353
    %v548 = vpack.c.b16 %v356, %v354
    %v549 = vpack.c.b16 %v359, %v357
    %v550 = vpack.c.b16 %v360, %v358
    %v551 = vpack.c.b16 %v363, %v361
    %v552 = vpack.c.b16 %v364, %v362
    %v553 = vpack.c.b16 %v367, %v365
    %v554 = vpack.c.b16 %v368, %v366
    %v555 = vpack.c.b16 %v371, %v369
    %v556 = vpack.c.b16 %v372, %v370
    %v557 = vpack.c.b16 %v375, %v373
    %v558 = vpack.c.b16 %v376, %v374
    %v559 = vpack.c.b16 %v379, %v377
    %v560 = vpack.c.b16 %v380, %v378
    %v561 = vpack.c.b16 %v383, %v381
    %v562 = vpack.c.b16 %v384, %v382
    %v563 = vpack.c.b16 %v387, %v385
    %v564 = vpack.c.b16 %v388, %v386
    %v565 = vpack.c.b16 %v391, %v389
    %v566 = vpack.c.b16 %v392, %v390
    %v567 = vpack.c.b16 %v395, %v393
    %v568 = vpack.c.b16 %v396, %v394
    %v569 = vpack.c.b16 %v399, %v397
    %v570 = vpack.c.b16 %v400, %v398
    %v571 = vpack.c.b16 %v403, %v401
    %v572 = vpack.c.b16 %v404, %v402
    %v573 = vpack.c.b16 %v407, %v405
    %v574 = vpack.c.b16 %v408, %v406
    %v575 = vpack.c.b16 %v411, %v409
    %v576 = vpack.c.b16 %v412, %v410
    %v577 = vpack.c.b16 %v415, %v413
    %v578 = vpack.c.b16 %v416, %v414
    %v579 = vpack.c.b16 %v419, %v417
    %v580 = vpack.c.b16 %v420, %v418
    %v581 = vpack.c.b16 %v423, %v421
    %v582 = vpack.c.b16 %v424, %v422
    %v583 = vpack.c.b16 %v427, %v425
    %v584 = vpack.c.b16 %v428, %v426
    %v585 = vpack.c.b16 %v431, %v429
    %v586 = vpack.c.b16 %v432, %v430
    %v587 = vpack.c.b16 %v435, %v433
    %v588 = vpack.c.b16 %v436, %v434
    %v589 = vpack.c.b16 %v439, %v437
    %v590 = vpack.c.b16 %v440, %v438
    %v591 = vpack.c.b16 %v443, %v441
    %v592 = vpack.c.b16 %v444, %v442
    %v593 = vpack.c.b16 %v447, %v445
    %v594 = vpack.c.b16 %v448, %v446
    %v595 = vpack.c.b16 %v451, %v449
    %v596 = vpack.c.b16 %v452, %v450
    %v597 = vpack.c.b16 %v455, %v453
    %v598 = vpack.c.b16 %v456, %v454
    %v599 = vpack.c.b16 %v459, %v457
    %v600 = vpack.c.b16 %v460, %v458
    %v601 = vpack.c.b16 %v463, %v461
    %v602 = vpack.c.b16 %v464, %v462
    %v603 = vpack.c.b16 %v467, %v465
    %v604 = vpack.c.b16 %v468, %v466
    %v605 = vpack.c.b16 %v471, %v469
    %v606 = vpack.c.b16 %v472, %v470
    %v607 = vpack.c.b16 %v475, %v473
    %v608 = vpack.c.b16 %v476, %v474
    %v609 = vpack.c.b16 %v479, %v477
    %v610 = vpack.c.b16 %v480, %v478
    %v611 = vpack.c.b16 %v483, %v481
    %v612 = vpack.c.b16 %v484, %v482
    %v613 = vpack.c.b16 %v487, %v485
    %v614 = vpack.c.b16 %v488, %v486
    %v615 = vpack.c.b16 %v491, %v489
    %v616 = vpack.c.b16 %v492, %v490
    %v617 = vpack.c.b16 %v495, %v493
    %v618 = vpack.c.b16 %v496, %v494
    %v619 = vpack.c.b16 %v499, %v497
    %v620 = vpack.c.b16 %v500, %v498
    %v621 = vpack.c.b16 %v503, %v501
    %v622 = vpack.c.b16 %v504, %v502
    %v623 = vpack.c.b16 %v507, %v505
    %v624 = vpack.c.b16 %v508, %v506
    %v625 = vpack.c.b16 %v511, %v509
    %v626 = vpack.c.b16 %v512, %v510
    %v627 = vpack.c.b16 %v515, %v513
    %v628 = vpack.c.b16 %v516, %v514
    %741 = vmatprep.subr.bf16.mxu0 %v518
    %742 = vmatpush1.bf16.msra.mxu0 %v517
    %743 = vmatprep.subr.bf16.mxu0 %v520
    %744 = vmatpush1.bf16.msra.mxu0 %v519
    %745 = vmatprep.subr.bf16.mxu0 %v522
    %746 = vmatpush1.bf16.msra.mxu0 %v521
    %747 = vmatprep.subr.bf16.mxu0 %v524
    %748 = vmatpush1.bf16.msra.mxu0 %v523
    %749 = vmatprep.subr.bf16.mxu0 %v526
    %750 = vmatpush1.bf16.msra.mxu0 %v525
    %751 = vmatprep.subr.bf16.mxu0 %v528
    %752 = vmatpush1.bf16.msra.mxu0 %v527
    %753 = vmatprep.subr.bf16.mxu0 %v530
    %754 = vmatpush1.bf16.msra.mxu0 %v529
    %755 = vmatprep.subr.bf16.mxu0 %v532
    %756 = vmatpush1.bf16.msra.mxu0 %v531
    %757 = vmatprep.subr.bf16.mxu0 %v534
    %758 = vmatpush1.bf16.msra.mxu0 %v533
    %759 = vmatprep.subr.bf16.mxu0 %v536
    %760 = vmatpush1.bf16.msra.mxu0 %v535
    %761 = vmatprep.subr.bf16.mxu0 %v538
    %762 = vmatpush1.bf16.msra.mxu0 %v537
    %763 = vmatprep.subr.bf16.mxu0 %v540
    %764 = vmatpush1.bf16.msra.mxu0 %v539
    %765 = vmatprep.subr.bf16.mxu0 %v542
    %766 = vmatpush1.bf16.msra.mxu0 %v541
    %767 = vmatprep.subr.bf16.mxu0 %v544
    %768 = vmatpush1.bf16.msra.mxu0 %v543
    %769 = vmatprep.subr.bf16.mxu0 %v546
    %770 = vmatpush1.bf16.msra.mxu0 %v545
    %771 = vmatprep.subr.bf16.mxu0 %v548
    %772 = vmatpush1.bf16.msra.mxu0 %v547
    %773 = vmatprep.mubr.bf16.mxu0 %v168
    %774 = vmatmul.mubr.bf16.gmra.mrb[0].mxu0 %v167
    %v775 = vpop.f32.mrb[0].mxu0
    %v776 = vadd.f32 %v149, %v775
    %v777 = vpop.f32.mrb[0].mxu0
    %v778 = vadd.f32 %v153, %v777
    %v779 = vpop.f32.mrb[0].mxu0
    %v780 = vpop.f32.mrb[0].mxu0
    %781 = vdwg.mxu0
    %782 = vmatprep.subr.bf16.mxu0 %v550
    %783 = vmatpush1.bf16.msra.mxu0 %v549
    %784 = vmatprep.subr.bf16.mxu0 %v552
    %785 = vmatpush1.bf16.msra.mxu0 %v551
    %786 = vmatprep.subr.bf16.mxu0 %v554
    %787 = vmatpush1.bf16.msra.mxu0 %v553
    %788 = vmatprep.subr.bf16.mxu0 %v556
    %789 = vmatpush1.bf16.msra.mxu0 %v555
    %790 = vmatprep.subr.bf16.mxu0 %v558
    %791 = vmatpush1.bf16.msra.mxu0 %v557
    %792 = vmatprep.subr.bf16.mxu0 %v560
    %793 = vmatpush1.bf16.msra.mxu0 %v559
    %794 = vmatprep.subr.bf16.mxu0 %v562
    %795 = vmatpush1.bf16.msra.mxu0 %v561
    %796 = vmatprep.subr.bf16.mxu0 %v564
    %797 = vmatpush1.bf16.msra.mxu0 %v563
    %798 = vmatprep.subr.bf16.mxu0 %v566
    %799 = vmatpush1.bf16.msra.mxu0 %v565
    %800 = vmatprep.subr.bf16.mxu0 %v568
    %801 = vmatpush1.bf16.msra.mxu0 %v567
    %802 = vmatprep.subr.bf16.mxu0 %v570
    %803 = vmatpush1.bf16.msra.mxu0 %v569
    %804 = vmatprep.subr.bf16.mxu0 %v572
    %805 = vmatpush1.bf16.msra.mxu0 %v571
    %806 = vmatprep.subr.bf16.mxu0 %v574
    %807 = vmatpush1.bf16.msra.mxu0 %v573
    %808 = vmatprep.subr.bf16.mxu0 %v576
    %809 = vmatpush1.bf16.msra.mxu0 %v575
    %810 = vmatprep.subr.bf16.mxu0 %v578
    %811 = vmatpush1.bf16.msra.mxu0 %v577
    %812 = vmatprep.subr.bf16.mxu0 %v580
    %813 = vmatpush1.bf16.msra.mxu0 %v579
    %814 = vmatprep.mubr.bf16.mxu0 %v170
    %815 = vmatmul.mubr.bf16.gmra.mrb[0].mxu0 %v169
    %v816 = vpop.f32.mrb[0].mxu0
    %v817 = vadd.f32 %v776, %v816
    %v818 = vpop.f32.mrb[0].mxu0
    %v819 = vadd.f32 %v778, %v818
    %v820 = vpop.f32.mrb[0].mxu0
    %v821 = vpop.f32.mrb[0].mxu0
    %822 = vdwg.mxu0
    %823 = vmatprep.subr.bf16.mxu0 %v582
    %824 = vmatpush1.bf16.msra.mxu0 %v581
    %825 = vmatprep.subr.bf16.mxu0 %v584
    %826 = vmatpush1.bf16.msra.mxu0 %v583
    %827 = vmatprep.subr.bf16.mxu0 %v586
    %828 = vmatpush1.bf16.msra.mxu0 %v585
    %829 = vmatprep.subr.bf16.mxu0 %v588
    %830 = vmatpush1.bf16.msra.mxu0 %v587
    %831 = vmatprep.subr.bf16.mxu0 %v590
    %832 = vmatpush1.bf16.msra.mxu0 %v589
    %833 = vmatprep.subr.bf16.mxu0 %v592
    %834 = vmatpush1.bf16.msra.mxu0 %v591
    %835 = vmatprep.subr.bf16.mxu0 %v594
    %836 = vmatpush1.bf16.msra.mxu0 %v593
    %837 = vmatprep.subr.bf16.mxu0 %v596
    %838 = vmatpush1.bf16.msra.mxu0 %v595
    %839 = vmatprep.subr.bf16.mxu0 %v598
    %840 = vmatpush1.bf16.msra.mxu0 %v597
    %841 = vmatprep.subr.bf16.mxu0 %v600
    %842 = vmatpush1.bf16.msra.mxu0 %v599
    %843 = vmatprep.subr.bf16.mxu0 %v602
    %844 = vmatpush1.bf16.msra.mxu0 %v601
    %845 = vmatprep.subr.bf16.mxu0 %v604
    %846 = vmatpush1.bf16.msra.mxu0 %v603
    %847 = vmatprep.subr.bf16.mxu0 %v606
    %848 = vmatpush1.bf16.msra.mxu0 %v605
    %849 = vmatprep.subr.bf16.mxu0 %v608
    %850 = vmatpush1.bf16.msra.mxu0 %v607
    %851 = vmatprep.subr.bf16.mxu0 %v610
    %852 = vmatpush1.bf16.msra.mxu0 %v609
    %853 = vmatprep.subr.bf16.mxu0 %v612
    %854 = vmatpush1.bf16.msra.mxu0 %v611
    %855 = vmatprep.mubr.bf16.mxu0 %v172
    %856 = vmatmul.mubr.bf16.gmra.mrb[0].mxu0 %v171
    %v857 = vpop.f32.mrb[0].mxu0
    %v858 = vadd.f32 %v817, %v857
    %v859 = vpop.f32.mrb[0].mxu0
    %v860 = vadd.f32 %v819, %v859
    %v861 = vpop.f32.mrb[0].mxu0
    %v862 = vpop.f32.mrb[0].mxu0
    %863 = vdwg.mxu0
    %864 = vmatprep.subr.bf16.mxu0 %v614
    %865 = vmatpush1.bf16.msra.mxu0 %v613
    %866 = vmatprep.subr.bf16.mxu0 %v616
    %867 = vmatpush1.bf16.msra.mxu0 %v615
    %868 = vmatprep.subr.bf16.mxu0 %v618
    %869 = vmatpush1.bf16.msra.mxu0 %v617
    %870 = vmatprep.subr.bf16.mxu0 %v620
    %871 = vmatpush1.bf16.msra.mxu0 %v619
    %872 = vmatprep.subr.bf16.mxu0 %v622
    %873 = vmatpush1.bf16.msra.mxu0 %v621
    %874 = vmatprep.subr.bf16.mxu0 %v624
    %875 = vmatpush1.bf16.msra.mxu0 %v623
    %876 = vmatprep.subr.bf16.mxu0 %v626
    %877 = vmatpush1.bf16.msra.mxu0 %v625
    %878 = vmatprep.subr.bf16.mxu0 %v628
    %879 = vmatpush1.bf16.msra.mxu0 %v627
    %880 = vmatprep.subr.bf16.mxu0 0
    %881 = vmatpush1.bf16.msra.mxu0 0
    %882 = vmatprep.subr.bf16.mxu0 0
    %883 = vmatpush1.bf16.msra.mxu0 0
    %884 = vmatprep.subr.bf16.mxu0 0
    %885 = vmatpush1.bf16.msra.mxu0 0
    %886 = vmatprep.subr.bf16.mxu0 0
    %887 = vmatpush1.bf16.msra.mxu0 0
    %888 = vmatprep.subr.bf16.mxu0 0
    %889 = vmatpush1.bf16.msra.mxu0 0
    %890 = vmatprep.subr.bf16.mxu0 0
    %891 = vmatpush1.bf16.msra.mxu0 0
    %892 = vmatprep.subr.bf16.mxu0 0
    %893 = vmatpush1.bf16.msra.mxu0 0
    %894 = vmatprep.subr.bf16.mxu0 0
    %895 = vmatpush1.bf16.msra.mxu0 0
    %896 = vmatprep.mubr.bf16.mxu0 0
    %897 = vmatmul.mubr.bf16.gmra.mrb[0].mxu0 %v173
    %v898 = vpop.f32.mrb[0].mxu0
    %v899 = vadd.f32 %v858, %v898
    %v900 = vpop.f32.mrb[0].mxu0
    %v901 = vadd.f32 %v860, %v900
    %v902 = vpop.f32.mrb[0].mxu0
    %v903 = vpop.f32.mrb[0].mxu0
    %904 = vdwg.mxu0
    %vm905 = vcmp.gt.f32.partialorder %v899, 0.0
    %vm906 = vcmp.gt.f32.partialorder %v901, 0.0
    %v907 = vmul.f32 %v899, 0.2
    %v908 = vmul.f32 %v901, 0.2
    %v909 = vsel %vm905, %v899, %v907
    %v910 = vsel %vm906, %v901, %v908
    %v911 = vpack.c.bf16 %v909, %v909
    %v912 = vpack.c.bf16 %v910, %v910
    %v913 = vld [vmem:[%s4] sm:$0xf]
    %v914 = vld [vmem:[%s4 + $0x4] sm:$0xf]
    %v915 = vld [vmem:[%s4 + $0x8] sm:$0xf]
    %v916 = vld [vmem:[%s4 + $0xc] sm:$0xf]
    %v917 = vld [vmem:[%s4 + $0x10] sm:$0xf]
    %v918 = vld [vmem:[%s4 + $0x14] sm:$0xf]
    %v919 = vld [vmem:[%s4 + $0x18] sm:$0xf]
    %v920 = vld [vmem:[%s4 + $0x1c] sm:$0xf]
    %v921 = vld [vmem:[%s4 + $0x20] sm:$0xf]
    %v922 = vld [vmem:[%s4 + $0x24] sm:$0xf]
    %v923 = vld [vmem:[%s4 + $0x28] sm:$0xf]
    %v924 = vld [vmem:[%s4 + $0x2c] sm:$0xf]
    %v925 = vld [vmem:[%s4 + $0x30] sm:$0xf]
    %v926 = vld [vmem:[%s4 + $0x34] sm:$0xf]
    %v927 = vld [vmem:[%s4 + $0x38] sm:$0xf]
    %v928 = vld [vmem:[%s4 + $0x3c] sm:$0xf]
    %v929 = vld [vmem:[%s4 + $0x40] sm:$0xf]
    %v930 = vld [vmem:[%s4 + $0x44] sm:$0xf]
    %v931 = vld [vmem:[%s4 + $0x48] sm:$0xf]
    %v932 = vld [vmem:[%s4 + $0x4c] sm:$0xf]
    %v933 = vld [vmem:[%s4 + $0x50] sm:$0xf]
    %v934 = vld [vmem:[%s4 + $0x54] sm:$0xf]
    %v935 = vld [vmem:[%s4 + $0x58] sm:$0xf]
    %v936 = vld [vmem:[%s4 + $0x5c] sm:$0xf]
    %v937 = vld [vmem:[%s4 + $0x60] sm:$0xf]
    %v938 = vld [vmem:[%s4 + $0x64] sm:$0xf]
    %v939 = vld [vmem:[%s4 + $0x68] sm:$0xf]
    %v940 = vld [vmem:[%s4 + $0x6c] sm:$0xf]
    %v941 = vld [vmem:[%s4 + $0x70] sm:$0xf]
    %v942 = vld [vmem:[%s4 + $0x74] sm:$0xf]
    %v943 = vld [vmem:[%s4 + $0x78] sm:$0xf]
    %v944 = vld [vmem:[%s4 + $0x7c] sm:$0xf]
    %v945 = vld [vmem:[%s5] sm:$0x1]
    %v947 = vlaneseq
    %v948 = vshrl.u32 %v947, 7
    %v949 = vsub.s32 0, %v948
    %v950 = vrot.slane %v945, %v949
    %v984 = vunpack.c.l.b16 %v913
    %v985 = vunpack.c.l.b16 %v914
    %v986 = vunpack.c.l.b16 %v915
    %v987 = vunpack.c.l.b16 %v916
    %v988 = vunpack.c.l.b16 %v917
    %v989 = vunpack.c.l.b16 %v918
    %v990 = vunpack.c.l.b16 %v919
    %v991 = vunpack.c.l.b16 %v920
    %v992 = vunpack.c.l.b16 %v921
    %v993 = vunpack.c.l.b16 %v922
    %v994 = vunpack.c.l.b16 %v923
    %v995 = vunpack.c.l.b16 %v924
    %v996 = vunpack.c.l.b16 %v925
    %v997 = vunpack.c.l.b16 %v926
    %v998 = vunpack.c.l.b16 %v927
    %v999 = vunpack.c.l.b16 %v928
    %v1000 = vunpack.c.l.b16 %v929
    %v1001 = vunpack.c.l.b16 %v930
    %v1002 = vunpack.c.l.b16 %v931
    %v1003 = vunpack.c.l.b16 %v932
    %v1004 = vunpack.c.l.b16 %v933
    %v1005 = vunpack.c.l.b16 %v934
    %v1006 = vunpack.c.l.b16 %v935
    %v1007 = vunpack.c.l.b16 %v936
    %v1008 = vunpack.c.l.b16 %v937
    %v1009 = vunpack.c.l.b16 %v938
    %v1010 = vunpack.c.l.b16 %v939
    %v1011 = vunpack.c.l.b16 %v940
    %v1012 = vunpack.c.l.b16 %v941
    %v1013 = vunpack.c.l.b16 %v942
    %v1014 = vunpack.c.l.b16 %v943
    %v1015 = vunpack.c.l.b16 %v944
    %v1016 = vpack.c.b16 %v985, %v984
    %v1017 = vpack.c.b16 %v987, %v986
    %v1018 = vpack.c.b16 %v989, %v988
    %v1019 = vpack.c.b16 %v991, %v990
    %v1020 = vpack.c.b16 %v993, %v992
    %v1021 = vpack.c.b16 %v995, %v994
    %v1022 = vpack.c.b16 %v997, %v996
    %v1023 = vpack.c.b16 %v999, %v998
    %v1024 = vpack.c.b16 %v1001, %v1000
    %v1025 = vpack.c.b16 %v1003, %v1002
    %v1026 = vpack.c.b16 %v1005, %v1004
    %v1027 = vpack.c.b16 %v1007, %v1006
    %v1028 = vpack.c.b16 %v1009, %v1008
    %v1029 = vpack.c.b16 %v1011, %v1010
    %v1030 = vpack.c.b16 %v1013, %v1012
    %v1031 = vpack.c.b16 %v1015, %v1014
    %1048 = vmatprep.subr.bf16.mxu0 0
    %1049 = vmatpush1.bf16.msra.mxu0 %v1016
    %1050 = vmatprep.subr.bf16.mxu0 0
    %1051 = vmatpush1.bf16.msra.mxu0 %v1017
    %1052 = vmatprep.subr.bf16.mxu0 0
    %1053 = vmatpush1.bf16.msra.mxu0 %v1018
    %1054 = vmatprep.subr.bf16.mxu0 0
    %1055 = vmatpush1.bf16.msra.mxu0 %v1019
    %1056 = vmatprep.subr.bf16.mxu0 0
    %1057 = vmatpush1.bf16.msra.mxu0 %v1020
    %1058 = vmatprep.subr.bf16.mxu0 0
    %1059 = vmatpush1.bf16.msra.mxu0 %v1021
    %1060 = vmatprep.subr.bf16.mxu0 0
    %1061 = vmatpush1.bf16.msra.mxu0 %v1022
    %1062 = vmatprep.subr.bf16.mxu0 0
    %1063 = vmatpush1.bf16.msra.mxu0 %v1023
    %1064 = vmatprep.subr.bf16.mxu0 0
    %1065 = vmatpush1.bf16.msra.mxu0 %v1024
    %1066 = vmatprep.subr.bf16.mxu0 0
    %1067 = vmatpush1.bf16.msra.mxu0 %v1025
    %1068 = vmatprep.subr.bf16.mxu0 0
    %1069 = vmatpush1.bf16.msra.mxu0 %v1026
    %1070 = vmatprep.subr.bf16.mxu0 0
    %1071 = vmatpush1.bf16.msra.mxu0 %v1027
    %1072 = vmatprep.subr.bf16.mxu0 0
    %1073 = vmatpush1.bf16.msra.mxu0 %v1028
    %1074 = vmatprep.subr.bf16.mxu0 0
    %1075 = vmatpush1.bf16.msra.mxu0 %v1029
    %1076 = vmatprep.subr.bf16.mxu0 0
    %1077 = vmatpush1.bf16.msra.mxu0 %v1030
    %1078 = vmatprep.subr.bf16.mxu0 0
    %1079 = vmatpush1.bf16.msra.mxu0 %v1031
    %1080 = vmatprep.mubr.bf16.mxu0 %v912
    %1081 = vmatmul.mubr.bf16.gmra.mrb[0].mxu0 %v911
    %v1082 = vpop.f32.mrb[0].mxu0
    %v1083 = vadd.f32 %v950, %v1082
    %v1084 = vpop.f32.mrb[0].mxu0
    %v1085 = vpop.f32.mrb[0].mxu0
    %v1086 = vpop.f32.mrb[0].mxu0
    %1087 = vdwg.mxu0
    %vm1088 = vcmp.gt.f32.partialorder %v1083, 0.0
    %v1089 = vmul.f32 %v1083, 0.2
    %v1090 = vsel %vm1088, %v1083, %v1089
    %v1091 = vld [vmem:[%s6] sm:$0x1]
    %v1092 = vld [vmem:[%s1] sm:$0x1]
    %1093 = vmatprep.subr.mxu0 0.0
    %1094 = vmatpush1.xpose.msra.mxu0 %v1090
    %1095 = vmatprep.subr.mxu0 0.0
    %1096 = vmatpush1.xpose.msra.mxu0 0.0
    %1097 = vmatprep.subr.mxu0 0.0
    %1098 = vmatpush1.xpose.msra.mxu0 0.0
    %1099 = vmatprep.subr.mxu0 0.0
    %1100 = vmatpush1.xpose.msra.mxu0 0.0
    %1101 = vmatprep.subr.mxu0 0.0
    %1102 = vmatpush1.xpose.msra.mxu0 0.0
    %1103 = vmatprep.subr.mxu0 0.0
    %1104 = vmatpush1.xpose.msra.mxu0 0.0
    %1105 = vmatprep.subr.mxu0 0.0
    %1106 = vmatpush1.xpose.msra.mxu0 0.0
    %1107 = vmatprep.subr.mxu0 0.0
    %1108 = vmatpush1.xpose.msra.mxu0 0.0
    %1109 = vmatprep.subr.mxu0 0.0
    %1110 = vmatpush1.xpose.msra.mxu0 0.0
    %1111 = vmatprep.subr.mxu0 0.0
    %1112 = vmatpush1.xpose.msra.mxu0 0.0
    %1113 = vmatprep.subr.mxu0 0.0
    %1114 = vmatpush1.xpose.msra.mxu0 0.0
    %1115 = vmatprep.subr.mxu0 0.0
    %1116 = vmatpush1.xpose.msra.mxu0 0.0
    %1117 = vmatprep.subr.mxu0 0.0
    %1118 = vmatpush1.xpose.msra.mxu0 0.0
    %1119 = vmatprep.subr.mxu0 0.0
    %1120 = vmatpush1.xpose.msra.mxu0 0.0
    %1121 = vmatprep.subr.mxu0 0.0
    %1122 = vmatpush1.xpose.msra.mxu0 0.0
    %1123 = vmatprep.subr.mxu0 0.0
    %1124 = vmatpush1.xpose.msra.mxu0 0.0
    %1125 = vmatprep.subr.mxu0 0.0
    %1126 = vmatpush1.xpose.msra.mxu0 0.0
    %1127 = vmatprep.subr.mxu0 0.0
    %1128 = vmatpush1.xpose.msra.mxu0 0.0
    %1129 = vmatprep.subr.mxu0 0.0
    %1130 = vmatpush1.xpose.msra.mxu0 0.0
    %1131 = vmatprep.subr.mxu0 0.0
    %1132 = vmatpush1.xpose.msra.mxu0 0.0
    %1133 = vmatprep.subr.mxu0 0.0
    %1134 = vmatpush1.xpose.msra.mxu0 0.0
    %1135 = vmatprep.subr.mxu0 0.0
    %1136 = vmatpush1.xpose.msra.mxu0 0.0
    %1137 = vmatprep.subr.mxu0 0.0
    %1138 = vmatpush1.xpose.msra.mxu0 0.0
    %1139 = vmatprep.subr.mxu0 0.0
    %1140 = vmatpush1.xpose.msra.mxu0 0.0
    %1141 = vmatprep.subr.mxu0 0.0
    %1142 = vmatpush1.xpose.msra.mxu0 0.0
    %1143 = vmatprep.subr.mxu0 0.0
    %1144 = vmatpush1.xpose.msra.mxu0 0.0
    %1145 = vmatprep.subr.mxu0 0.0
    %1146 = vmatpush1.xpose.msra.mxu0 0.0
    %1147 = vmatprep.subr.mxu0 0.0
    %1148 = vmatpush1.xpose.msra.mxu0 0.0
    %1149 = vmatprep.subr.mxu0 0.0
    %1150 = vmatpush1.xpose.msra.mxu0 0.0
    %1151 = vmatprep.subr.mxu0 0.0
    %1152 = vmatpush1.xpose.msra.mxu0 0.0
    %1153 = vmatprep.subr.mxu0 0.0
    %1154 = vmatpush1.xpose.msra.mxu0 0.0
    %1155 = vmatprep.subr.mxu0 0.0
    %1156 = vmatpush1.xpose.msra.mxu0 0.0
    %1157 = vmatprep.mubr.f32.mxu0 0.0
    %1158 = vmatmul.mubr.f32.gmra.mrb[0].mxu0 %v1091
    %v1159 = vpop.f32.mrb[0].mxu0
    %v1160 = vadd.f32 %v1092, %v1159
    %v1161 = vpop.f32.mrb[0].mxu0
    %1162 = vdwg.mxu0
    %v1163 = vxor.u32 %v1160, 2147483648
    %v1164 = vmul.f32 %v1163, 1.442695
    %v1165 = vpow.pop %v1164
    %v1166 = vadd.f32 %v1165, 1.0
    %v1167 = vrcp.pop %v1166
    %v1168 = vmul.f32 1.0, %v1167
    %vm1169 = vcmask 57344
    %1170 = vst.msk [vmem:[#allocation2] sm:$0x1] %vm1169, %v1168
    // Predicated region
    $region30: #{conditional_discriminator.1} parent=1 // pred_check
      _
    $region31: #{conditional_discriminator.1} parent=1 // pred_check_branch
      %1172 = sbr.rel (0) target = $region33
    $region32: #{conditional_discriminator.1} parent=1 // pred_region
      %s1174 = ssub.s32 16, 16
      %1175 = vsyncadd [#allocation3], %s1174
      %s1177 = sshll.u32 [#allocation2], 4
      %s1178 = int_to_ptr.vmem [resolvable:$true] %s1177
      %1180 = dma.vmem_to_hbm [thread:$0]  %s1178, 16, %s7, [#allocation3]
    $region33: #{conditional_discriminator.1} parent=1 // pred_fallthru
      _
    // Predicated region
    $region34: #{conditional_discriminator.1} parent=1 // pred_check
      _
    $region35: #{conditional_discriminator.1} parent=1 // pred_check_branch
      %1182 = sbr.rel (0) target = $region37
    $region36: #{conditional_discriminator.1} parent=1 // pred_region
      %1183 = dma.done [#allocation3], 16
    $region37: #{conditional_discriminator.1} parent=1 // pred_fallthru
      _
    %1184 = vsyncpa [#allocation3], 1

</llo_original>
